<compile_context>
chip_gen: v6e
topology: v6e:2x2x1
jax: 0.10.0
libtpu: 0.0.40
codegen_flags: <defaults>
</compile_context>

<pallas_src>
import math

import jax
import jax.numpy as jnp
from jax.experimental import pallas as pl
from jax.experimental.pallas import tpu as pltpu


def _pe_add_kernel(x_ref, pe_ref, o_ref):
    # x_ref / o_ref: (tB, tR, C) tile; pe_ref: (tR, C) tile shared across batch.
    # Pure memory-bound add in x.dtype (PE is pre-cast in the wrapper).
    o_ref[...] = x_ref[...] + pe_ref[...][None]


def _build_pe_table(S, D):
    """(S, D) f32 sinusoidal table, identical to the PyTorch buffer."""
    pos = jnp.arange(S, dtype=jnp.float32)[:, None]                      # (S, 1)
    div_term = jnp.exp(jnp.arange(0, D, 2, dtype=jnp.float32)
                       * (-math.log(10000.0) / D))                       # (D/2,)
    angles = pos * div_term                                              # (S, D/2)
    # Interleave: column 2k -> sin, column 2k+1 -> cos.
    return jnp.stack([jnp.sin(angles), jnp.cos(angles)], axis=-1).reshape(S, D)


def _sublane_multiple(dtype):
    """Row-tile rounding for the dtype's sublane packing (8 f32, 16 bf16, 32 int8)."""
    return {4: 8, 2: 16, 1: 32}.get(jnp.dtype(dtype).itemsize, 8)


def _choose_tiles(B, R, C, dtype, budget_bytes=2 * 1024 * 1024):
    """Pick (tB, tR): batch elems per step and rows per tile (sublane-rounded)."""
    itemsize = jnp.dtype(dtype).itemsize
    sub = _sublane_multiple(dtype)
    row_bytes = C * itemsize
    slab = R * row_bytes                                  # one full batch element
    if slab <= budget_bytes:
        # Small per-batch slab: take all rows and fold several batch elements
        # per grid step to amortize the ~0.35 us per-step overhead.
        tR = R
        tB = int(max(1, min(B, budget_bytes // max(slab, 1))))
    else:
        tB = 1
        tR = int((budget_bytes // row_bytes) // sub * sub)
        # Sub-row floor only overshoots the budget for absurdly wide rows
        # (C * itemsize * sub > 2 MiB); acceptable safety clamp.
        tR = max(sub, min(tR, R))
    # v7x has 2 TensorCores: expose >= 2 steps on the (parallel) row axis when
    # that can be done without breaking sublane alignment.
    if pl.cdiv(R, tR) * pl.cdiv(B, tB) == 1 and R >= 2 * sub:
        tR = max(sub, ((pl.cdiv(R, 2) + sub - 1) // sub) * sub)
    return tB, tR


def positional_encoding(x, *, donate=False):
    """x: (B, S, D) float array. Returns x + sinusoidal PE, same shape/dtype."""
    B, S, D = x.shape
    assert D % 2 == 0, "d_model must be even (same constraint as the PyTorch module)"

    dtype = x.dtype
    itemsize = jnp.dtype(dtype).itemsize

    # PE in x.dtype: matches the reference (pe cast before the add) and halves
    # PE HBM traffic / VMEM for low-precision inputs.
    pe = _build_pe_table(S, D).astype(dtype)                      # (S, D)

    # Lane-dense layout: fold (S, D) -> (R, 128) when D is not already a
    # multiple of 128 (avoids masked partial-lane stores for D = 32 / 64 ...).
    lane_dense = (D % 128 != 0) and ((S * D) % 128 == 0)
    if lane_dense:
        R, C = (S * D) // 128, 128
        x_in, pe_in = x.reshape(B, R, C), pe.reshape(R, C)
    else:
        R, C = S, D
        x_in, pe_in = x, pe

    tB, tR = _choose_tiles(B, R, C, dtype)
    n_r, n_b = pl.cdiv(R, tR), pl.cdiv(B, tB)

    # x + out + pe tiles, double-buffered, plus slack — instead of a flat 48 MiB.
    tile_bytes = (2 * tB * tR * C + tR * C) * itemsize
    vmem_limit = int(min(64 << 20, max(4 << 20, 2 * tile_bytes + (1 << 20))))

    cost = pl.CostEstimate(
        flops=B * S * D,                                  # one add per element
        transcendentals=0,                                # table precomputed outside
        bytes_accessed=(2 * B * S * D + S * D) * itemsize,
    )

    out = pl.pallas_call(
        _pe_add_kernel,
        out_shape=jax.ShapeDtypeStruct((B, R, C), dtype),
        grid_spec=pltpu.PrefetchScalarGridSpec(
            num_scalar_prefetch=0,
            # Rows outermost, batch innermost: the PE block index is constant
            # across the batch axis, so its tile stays resident in VMEM.
            grid=(n_r, n_b),
            in_specs=[
                pl.BlockSpec((tB, tR, C), lambda r, b: (b, r, 0)),   # x
                pl.BlockSpec((tR, C),     lambda r, b: (r, 0)),      # pe (ignores batch)
            ],
            out_specs=pl.BlockSpec((tB, tR, C), lambda r, b: (b, r, 0)),
        ),
        compiler_params=pltpu.CompilerParams(
            # Megacore (v7x) shards on the row axis -> each PE tile fetched once
            # chip-wide; measured-neutral on single-TC v5e/v6e.
            dimension_semantics=("parallel", "arbitrary"),
            vmem_limit_bytes=vmem_limit,
        ),
        cost_estimate=cost,
        input_output_aliases={0: 0} if donate else {},
    )(x_in, pe_in)

    return out.reshape(B, S, D) if lane_dense else out


def _reference_pe(x):
    """Plain-JAX reference mirroring the PyTorch module exactly."""
    B, S, D = x.shape
    pos = jnp.arange(S, dtype=jnp.float32)[:, None]
    div_term = jnp.exp(jnp.arange(0, D, 2, dtype=jnp.float32)
                       * (-math.log(10000.0) / D))
    pe = jnp.zeros((S, D), jnp.float32)
    pe = pe.at[:, 0::2].set(jnp.sin(pos * div_term))
    pe = pe.at[:, 1::2].set(jnp.cos(pos * div_term))
    return x + pe[None].astype(x.dtype)


if __name__ == "__main__":
    # Small shapes consistent with the module: batch=2, seq=8, d_model=32.
    key = jax.random.PRNGKey(0)
    B, S, D = 2, 8, 32
    x = jax.random.normal(key, (B, S, D), dtype=jnp.float32)

    out = jax.block_until_ready(positional_encoding(x))

    ref = _reference_pe(x)
    assert out.shape == x.shape and out.dtype == x.dtype
    assert jnp.allclose(out, ref, atol=1e-5, rtol=1e-5), "mismatch vs reference"

    print("KERNEL_OK")
</pallas_src>

<mosaic_0001>
module attributes {stable_mosaic.version = 11 : i64} {
  func.func @_pe_add_kernel(%arg0: i32, %arg1: i32, %arg2: memref<2x2x128xf32, #tpu.memory_space<vmem>>, %arg3: memref<2x128xf32, #tpu.memory_space<vmem>>, %arg4: memref<2x2x128xf32, #tpu.memory_space<vmem>>) attributes {dimension_semantics = [#tpu.dimension_semantics<parallel>, #tpu.dimension_semantics<arbitrary>], iteration_bounds = array<i64: 1, 1>, scalar_prefetch = 0 : i64, scratch_operands = 0 : i64, tpu.core_type = #tpu.core_type<tc>, window_params = [{transform_indices = @transform_0, window_bounds = array<i64: 2, 2, 128>}, {transform_indices = @transform_1, window_bounds = array<i64: 2, 128>}, {transform_indices = @transform_2, window_bounds = array<i64: 2, 2, 128>}]} {
    %c0 = arith.constant 0 : index
    %c0_0 = arith.constant 0 : index
    %c0_1 = arith.constant 0 : index
    %0 = vector.load %arg2[%c0, %c0_0, %c0_1] : memref<2x2x128xf32, #tpu.memory_space<vmem>>, vector<2x2x128xf32>
    %c0_2 = arith.constant 0 : index
    %c0_3 = arith.constant 0 : index
    %1 = vector.load %arg3[%c0_2, %c0_3] : memref<2x128xf32, #tpu.memory_space<vmem>>, vector<2x128xf32>
    %2 = vector.shape_cast %1 : vector<2x128xf32> to vector<1x2x128xf32>
    %3 = vector.broadcast %2 : vector<1x2x128xf32> to vector<2x2x128xf32>
    %4 = arith.addf %0, %3 : vector<2x2x128xf32>
    %c0_4 = arith.constant 0 : index
    %c0_5 = arith.constant 0 : index
    %c0_6 = arith.constant 0 : index
    %5 = vector.load %arg4[%c0_4, %c0_5, %c0_6] : memref<2x2x128xf32, #tpu.memory_space<vmem>>, vector<2x2x128xf32>
    tpu.vector_store %arg4[%c0_4, %c0_5, %c0_6], %4 {strides = array<i32>} : memref<2x2x128xf32, #tpu.memory_space<vmem>>, vector<2x2x128xf32>,
    return
  }
  func.func @transform_0(%arg0: i32, %arg1: i32) -> (i32, i32, i32) {
    %c0_i32 = arith.constant 0 : i32
    %c0_i32_0 = arith.constant 0 : i32
    return %arg1, %arg0, %c0_i32 : i32, i32, i32
  }
  func.func @transform_1(%arg0: i32, %arg1: i32) -> (i32, i32) {
    %c0_i32 = arith.constant 0 : i32
    %c0_i32_0 = arith.constant 0 : i32
    return %arg0, %c0_i32 : i32, i32
  }
  func.func @transform_2(%arg0: i32, %arg1: i32) -> (i32, i32, i32) {
    %c0_i32 = arith.constant 0 : i32
    %c0_i32_0 = arith.constant 0 : i32
    return %arg1, %arg0, %c0_i32 : i32, i32, i32
  }
}

</mosaic_0001>

<llo_original>
// kernel: tpu_custom_call.1
$region0: #{tpu_custom_call.1}
  #allocation0 [shape = 'u32[]', space=smem, size = 0x4, offset = 0x4, fixed_abs, tag = 'smem constant byte address 0x4 - core index']
  #allocation1 [shape = 'u32[144,128]{1,0:T(1,128)}', space=vmem, size = 0x12000, scoped, tag = 'internal scratch']
  %s0 = inlined_call_operand.hbm [shape: f32[2,2,128], index: 0, kind: input, shape index: {}]
  %s1 = inlined_call_operand.hbm [shape: f32[2,128], index: 1, kind: input, shape index: {}]
  %s2 = inlined_call_operand.hbm [shape: f32[2,2,128], index: 2, kind: output, shape index: {}]
  %s3 = sld [smem:[#allocation0]]
  $region26: #{tpu_custom_call.1} parent=0
    _
  %s5 = ssub.s32 1, %s3
  %s6 = scalar_select 0, %s5, %s3
  $region1: #{tpu_custom_call.1} parent=0
    #allocation2 [shape = 'u8[2048]{0}', space=vmem, size = 0x800, scoped, tag = 'input window, operand 0, single buffered']
    #allocation3 [shape = 's32[1]{0}', space=sflag, size = 0x4, scoped, tag = 'scoped memory for tpu_custom_call.1']
    #allocation4 [shape = 's32[1]{0}', space=sflag, size = 0x4, scoped, tag = 'scoped memory for tpu_custom_call.1']
    #allocation5 [shape = 'u8[1024]{0}', space=vmem, size = 0x400, scoped, tag = 'input window, operand 1, single buffered']
    #allocation6 [shape = 's32[1]{0}', space=sflag, size = 0x4, scoped, tag = 'scoped memory for tpu_custom_call.1']
    #allocation7 [shape = 'u8[2048]{0}', space=vmem, size = 0x800, scoped, tag = 'output window, operand 0, single buffered']
    %7 = vsyncpa [#allocation3], 0
    %8 = vsyncpa [#allocation6], 0
    %9 = vsyncpa [#allocation4], 0
    // Predicated region
    $region2: #{tpu_custom_call.1} parent=1 // pred_check
      _
    $region3: #{tpu_custom_call.1} parent=1 // pred_check_branch
      %11 = sbr.rel (0) target = $region5
    $region4: #{tpu_custom_call.1} parent=1 // pred_region
      %s13 = ssub.s32 64, 64
      %14 = vsyncadd [#allocation3], %s13
      %s15 = sshll.u32 [#allocation2], 4
      %s16 = int_to_ptr.vmem [resolvable:$true] %s15
      %21 = dma.hbm_to_vmem [thread:$0]  %s0, 64, %s16, [#allocation3], 32, 32, 2
    $region5: #{tpu_custom_call.1} parent=1 // pred_fallthru
      _
    // Predicated region
    $region6: #{tpu_custom_call.1} parent=1 // pred_check
      _
    $region7: #{tpu_custom_call.1} parent=1 // pred_check_branch
      %23 = sbr.rel (0) target = $region9
    $region8: #{tpu_custom_call.1} parent=1 // pred_region
      %s25 = ssub.s32 32, 32
      %26 = vsyncadd [#allocation6], %s25
      %s28 = sshll.u32 [#allocation5], 4
      %s29 = int_to_ptr.vmem [resolvable:$true] %s28
      %31 = dma.hbm_to_vmem [thread:$0]  %s1, 32, %s29, [#allocation6]
    $region9: #{tpu_custom_call.1} parent=1 // pred_fallthru
      _
    // Predicated region
    $region10: #{tpu_custom_call.1} parent=1 // pred_check
      _
    $region11: #{tpu_custom_call.1} parent=1 // pred_check_branch
      %33 = sbr.rel (0) target = $region13
    $region12: #{tpu_custom_call.1} parent=1 // pred_region
      %34 = dma.done [#allocation3], 64
    $region13: #{tpu_custom_call.1} parent=1 // pred_fallthru
      _
    // Predicated region
    $region14: #{tpu_custom_call.1} parent=1 // pred_check
      _
    $region15: #{tpu_custom_call.1} parent=1 // pred_check_branch
      %36 = sbr.rel (0) target = $region17
    $region16: #{tpu_custom_call.1} parent=1 // pred_region
      %37 = dma.done [#allocation6], 32
    $region17: #{tpu_custom_call.1} parent=1 // pred_fallthru
      _
    %v38 = vld [vmem:[#allocation2] sm:$0x3]
    %v39 = vld [vmem:[#allocation2 + $0x2] sm:$0x3]
    %v40 = vld [vmem:[#allocation5] sm:$0x3]
    %v41 = vadd.f32 %v38, %v40
    %v42 = vadd.f32 %v39, %v40
    %43 = vst [vmem:[#allocation7] sm:$0x3] %v41
    %44 = vst [vmem:[#allocation7 + $0x2] sm:$0x3] %v42
    // Predicated region
    $region18: #{tpu_custom_call.1} parent=1 // pred_check
      _
    $region19: #{tpu_custom_call.1} parent=1 // pred_check_branch
      %46 = sbr.rel (0) target = $region21
    $region20: #{tpu_custom_call.1} parent=1 // pred_region
      %s48 = ssub.s32 64, 64
      %49 = vsyncadd [#allocation4], %s48
      %s50 = sshll.u32 [#allocation7], 4
      %s51 = int_to_ptr.vmem [resolvable:$true] %s50
      %56 = dma.vmem_to_hbm [thread:$0]  %s51, 64, %s2, [#allocation4], 32, 32, 2
    $region21: #{tpu_custom_call.1} parent=1 // pred_fallthru
      _
    // Predicated region
    $region22: #{tpu_custom_call.1} parent=1 // pred_check
      _
    $region23: #{tpu_custom_call.1} parent=1 // pred_check_branch
      %58 = sbr.rel (0) target = $region25
    $region24: #{tpu_custom_call.1} parent=1 // pred_region
      %59 = dma.done [#allocation4], 64
    $region25: #{tpu_custom_call.1} parent=1 // pred_fallthru
      _
    %60 = vsyncpa [#allocation3], 1
    %61 = vsyncpa [#allocation6], 1
    %62 = vsyncpa [#allocation4], 1

</llo_original>
